<compile_context>
chip_gen: v6e
topology: v6e:2x2x1
jax: 0.10.0
libtpu: 0.0.40
codegen_flags: <defaults>
</compile_context>

<pallas_src>
import jax
import jax.numpy as jnp
from jax.experimental import pallas as pl
from jax.experimental.pallas import tpu as pltpu


def vae_kernel(x_ref, wcat_ref, bcat_ref, eps_ref, out_ref):
    d_lat = eps_ref.shape[-1]

    # Single fused MXU matmul: (tm, D_in) bf16 @ (D_in, 2*D_lat) bf16 -> f32 acc.
    y = jnp.dot(x_ref[...], wcat_ref[...],
                preferred_element_type=jnp.float32) + bcat_ref[...]

    mu = y[:, :d_lat]          # (tm, D_lat) f32
    logvar = y[:, d_lat:]      # (tm, D_lat) f32

    # reparameterize: z = eps * exp(0.5 * logvar) + mu  (EUP exp + VPU fma, f32)
    z = eps_ref[...] * jnp.exp(0.5 * logvar) + mu

    # y already holds [mu | logvar] contiguously; append z for one lane-dense
    # packed store: [ mu | logvar | z ].
    out_ref[...] = jnp.concatenate([y, z], axis=-1).astype(out_ref.dtype)


def _default_tile(B: int, multiple: int = 16) -> int:
    """Pick a batch tile: multiple of 16 (bf16 sublane pack), <= 512, divides B,
    and gives >= 2 grid steps when B allows (pipelining + v7x megacore)."""
    if B % multiple != 0:
        return B  # full-array block is always a legal BlockSpec
    cap = min(512, B)
    if B >= 2 * multiple:
        cap = min(cap, B // 2)
    cap = max(multiple, (cap // multiple) * multiple)
    for tm in range(cap, multiple - 1, -multiple):
        if B % tm == 0:
            return tm
    return B


def vae_forward(x, w_mu, b_mu, w_var, b_var, eps, *, tm=None):
    """x: [..., D_in]; w_*: [D_lat, D_in] (PyTorch layout); b_*: [D_lat];
    eps: [..., D_lat] standard normal noise. Returns dict {'z','mu','logvar'} (f32)."""
    orig_lead = x.shape[:-1]
    D_in = x.shape[-1]
    D_lat = w_mu.shape[0]
    assert w_var.shape == (D_lat, D_in) and w_mu.shape == (D_lat, D_in)

    # Flatten leading dims (nn.Linear semantics for >2-D inputs).
    x2 = x.reshape(-1, D_in)
    eps2 = eps.reshape(-1, D_lat)
    B = x2.shape[0]

    if tm is None:
        tm = _default_tile(B)
    assert B % tm == 0, "batch must be divisible by the tile"
    assert tm == B or tm % 16 == 0, "tile must be a multiple of 16 (bf16) or == B"

    # ---- wrapper-side glue: fuse + transpose weights, cast DMA-heavy operands ----
    wcat = jnp.concatenate(
        [jnp.asarray(w_mu, jnp.float32).T, jnp.asarray(w_var, jnp.float32).T],
        axis=1).astype(jnp.bfloat16)                         # (D_in, 2*D_lat)
    bcat = jnp.concatenate(
        [jnp.asarray(b_mu, jnp.float32), jnp.asarray(b_var, jnp.float32)]
    ).reshape(1, 2 * D_lat)                                  # (1, 2*D_lat) f32
    xb = x2.astype(jnp.bfloat16)                             # (B, D_in)
    eps_f = eps2.astype(jnp.float32)                         # (B, D_lat)

    grid = (B // tm,)
    x_spec = pl.BlockSpec((tm, D_in), lambda i: (i, 0))
    w_spec = pl.BlockSpec((D_in, 2 * D_lat), lambda i: (0, 0))   # VMEM-resident
    b_spec = pl.BlockSpec((1, 2 * D_lat), lambda i: (0, 0))      # VMEM-resident
    eps_spec = pl.BlockSpec((tm, D_lat), lambda i: (i, 0))
    out_spec = pl.BlockSpec((tm, 3 * D_lat), lambda i: (i, 0))

    cost = pl.CostEstimate(
        flops=2 * B * D_in * (2 * D_lat) + 4 * B * D_lat,
        transcendentals=B * D_lat,
        bytes_accessed=(xb.size * 2 + wcat.size * 2 + bcat.size * 4
                        + eps_f.size * 4 + B * 3 * D_lat * 4),
    )

    packed = pl.pallas_call(
        vae_kernel,
        out_shape=jax.ShapeDtypeStruct((B, 3 * D_lat), jnp.float32),
        grid_spec=pltpu.PrefetchScalarGridSpec(
            num_scalar_prefetch=0,
            grid=grid,
            in_specs=[x_spec, w_spec, b_spec, eps_spec],
            out_specs=out_spec,
        ),
        compiler_params=pltpu.CompilerParams(
            dimension_semantics=("parallel",)),
        cost_estimate=cost,
    )(xb, wcat, bcat, eps_f)

    mu = packed[:, :D_lat].reshape(*orig_lead, D_lat)
    logvar = packed[:, D_lat:2 * D_lat].reshape(*orig_lead, D_lat)
    z = packed[:, 2 * D_lat:].reshape(*orig_lead, D_lat)
    return {"z": z, "mu": mu, "logvar": logvar}


if __name__ == "__main__":
    # Deterministic synthetic parameters / inputs (no checkpoint load).
    B, D_in, D_lat = 64, 32, 16
    key = jax.random.PRNGKey(0)
    kx, kwm, kbm, kwv, kbv, keps = jax.random.split(key, 6)

    # PyTorch nn.Linear-style init: U(-1/sqrt(fan_in), 1/sqrt(fan_in))
    bound = 1.0 / (D_in ** 0.5)
    x = jax.random.normal(kx, (B, D_in), dtype=jnp.float32)
    w_mu = jax.random.uniform(kwm, (D_lat, D_in), jnp.float32, -bound, bound)
    b_mu = jax.random.uniform(kbm, (D_lat,), jnp.float32, -bound, bound)
    w_var = jax.random.uniform(kwv, (D_lat, D_in), jnp.float32, -bound, bound)
    b_var = jax.random.uniform(kbv, (D_lat,), jnp.float32, -bound, bound)
    eps = jax.random.normal(keps, (B, D_lat), dtype=jnp.float32)

    out = vae_forward(x, w_mu, b_mu, w_var, b_var, eps)
    jax.block_until_ready(out)

    # Reference in plain JAX with the same bf16-input / f32-accumulate contract.
    xb = x.astype(jnp.bfloat16)
    mu_ref = jnp.dot(xb, w_mu.T.astype(jnp.bfloat16),
                     preferred_element_type=jnp.float32) + b_mu
    logvar_ref = jnp.dot(xb, w_var.T.astype(jnp.bfloat16),
                         preferred_element_type=jnp.float32) + b_var
    z_ref = eps * jnp.exp(0.5 * logvar_ref) + mu_ref

    assert jnp.allclose(out["mu"], mu_ref, atol=1e-4, rtol=1e-4)
    assert jnp.allclose(out["logvar"], logvar_ref, atol=1e-4, rtol=1e-4)
    assert jnp.allclose(out["z"], z_ref, atol=1e-4, rtol=1e-4)

    # Loose sanity check vs the full-f32 math (bf16 input rounding only).
    mu_f32 = x @ w_mu.T + b_mu
    assert jnp.allclose(out["mu"], mu_f32, atol=3e-2, rtol=3e-2)

    print("KERNEL_OK")
</pallas_src>

<mosaic_0001>
module attributes {stable_mosaic.version = 11 : i64} {
  func.func @vae_kernel(%arg0: i32, %arg1: memref<32x32xbf16, #tpu.memory_space<vmem>>, %arg2: memref<32x32xbf16, #tpu.memory_space<vmem>>, %arg3: memref<1x32xf32, #tpu.memory_space<vmem>>, %arg4: memref<32x16xf32, #tpu.memory_space<vmem>>, %arg5: memref<32x48xf32, #tpu.memory_space<vmem>>) attributes {dimension_semantics = [#tpu.dimension_semantics<parallel>], iteration_bounds = array<i64: 2>, scalar_prefetch = 0 : i64, scratch_operands = 0 : i64, tpu.core_type = #tpu.core_type<tc>, window_params = [{transform_indices = @transform_0, window_bounds = array<i64: 32, 32>}, {pipeline_mode = #tpu.pipeline_mode<synchronous>, transform_indices = @transform_1, window_bounds = array<i64: 32, 32>}, {pipeline_mode = #tpu.pipeline_mode<synchronous>, transform_indices = @transform_2, window_bounds = array<i64: 1, 32>}, {transform_indices = @transform_3, window_bounds = array<i64: 32, 16>}, {transform_indices = @transform_4, window_bounds = array<i64: 32, 48>}]} {
    %c0 = arith.constant 0 : index
    %c0_0 = arith.constant 0 : index
    %0 = vector.load %arg1[%c0, %c0_0] : memref<32x32xbf16, #tpu.memory_space<vmem>>, vector<32x32xbf16>
    %c0_1 = arith.constant 0 : index
    %c0_2 = arith.constant 0 : index
    %1 = vector.load %arg2[%c0_1, %c0_2] : memref<32x32xbf16, #tpu.memory_space<vmem>>, vector<32x32xbf16>
    %cst = arith.constant dense<0.000000e+00> : vector<32x32xf32>
    %2 = tpu.matmul %0, %1, %cst {dimension_numbers = #tpu.dot_dimension_numbers<[1], [0], [0], [1], [0, 0, 1, 1], [], []>} : vector<32x32xbf16>, vector<32x32xbf16>, vector<32x32xf32> -> vector<32x32xf32>
    %c0_3 = arith.constant 0 : index
    %c0_4 = arith.constant 0 : index
    %3 = vector.load %arg3[%c0_3, %c0_4] : memref<1x32xf32, #tpu.memory_space<vmem>>, vector<1x32xf32>
    %4 = vector.broadcast %3 : vector<1x32xf32> to vector<32x32xf32>
    %5 = arith.addf %2, %4 : vector<32x32xf32>
    %6 = vector.extract_strided_slice %5 {offsets = [0, 0], sizes = [32, 16], strides = [1, 1]} : vector<32x32xf32> to vector<32x16xf32>
    %7 = vector.extract_strided_slice %5 {offsets = [0, 16], sizes = [32, 16], strides = [1, 1]} : vector<32x32xf32> to vector<32x16xf32>
    %c0_5 = arith.constant 0 : index
    %c0_6 = arith.constant 0 : index
    %8 = vector.load %arg4[%c0_5, %c0_6] : memref<32x16xf32, #tpu.memory_space<vmem>>, vector<32x16xf32>
    %cst_7 = arith.constant 5.000000e-01 : f32
    %9 = vector.broadcast %cst_7 : f32 to vector<32x16xf32>
    %10 = arith.mulf %9, %7 : vector<32x16xf32>
    %11 = math.exp %10 : vector<32x16xf32>
    %12 = arith.mulf %8, %11 : vector<32x16xf32>
    %13 = arith.addf %12, %6 : vector<32x16xf32>
    %14 = tpu.concatenate %5, %13 in 1 : vector<32x32xf32>, vector<32x16xf32> -> vector<32x48xf32>
    %c0_8 = arith.constant 0 : index
    %c0_9 = arith.constant 0 : index
    %15 = vector.load %arg5[%c0_8, %c0_9] : memref<32x48xf32, #tpu.memory_space<vmem>>, vector<32x48xf32>
    tpu.vector_store %arg5[%c0_8, %c0_9], %14 {strides = array<i32>} : memref<32x48xf32, #tpu.memory_space<vmem>>, vector<32x48xf32>,
    return
  }
  func.func @transform_0(%arg0: i32) -> (i32, i32) {
    %c0_i32 = arith.constant 0 : i32
    %c0_i32_0 = arith.constant 0 : i32
    return %arg0, %c0_i32 : i32, i32
  }
  func.func @transform_1(%arg0: i32) -> (i32, i32) {
    %c0_i32 = arith.constant 0 : i32
    %c0_i32_0 = arith.constant 0 : i32
    %c0_i32_1 = arith.constant 0 : i32
    return %c0_i32, %c0_i32_0 : i32, i32
  }
  func.func @transform_2(%arg0: i32) -> (i32, i32) {
    %c0_i32 = arith.constant 0 : i32
    %c0_i32_0 = arith.constant 0 : i32
    %c0_i32_1 = arith.constant 0 : i32
    return %c0_i32, %c0_i32_0 : i32, i32
  }
  func.func @transform_3(%arg0: i32) -> (i32, i32) {
    %c0_i32 = arith.constant 0 : i32
    %c0_i32_0 = arith.constant 0 : i32
    return %arg0, %c0_i32 : i32, i32
  }
  func.func @transform_4(%arg0: i32) -> (i32, i32) {
    %c0_i32 = arith.constant 0 : i32
    %c0_i32_0 = arith.constant 0 : i32
    return %arg0, %c0_i32 : i32, i32
  }
}

</mosaic_0001>

<llo_original>
// kernel: tpu_custom_call.1
$region0: #{tpu_custom_call.1}
  #allocation0 [shape = 'u32[]', space=smem, size = 0x4, offset = 0x4, fixed_abs, tag = 'smem constant byte address 0x4 - core index']
  #allocation1 [shape = 'u32[144,128]{1,0:T(1,128)}', space=vmem, size = 0x12000, scoped, tag = 'internal scratch']
  %s0 = inlined_call_operand.vmem [shape: bf16[64,32], index: 0, kind: input, shape index: {}]
  %s1 = inlined_call_operand.vmem [shape: bf16[32,32], index: 1, kind: input, shape index: {}]
  %s2 = inlined_call_operand.vmem [shape: f32[1,32], index: 2, kind: input, shape index: {}]
  %s3 = inlined_call_operand.vmem [shape: f32[64,16], index: 3, kind: input, shape index: {}]
  %s4 = inlined_call_operand.vmem [shape: f32[64,48], index: 4, kind: output, shape index: {}]
  %s5 = sld [smem:[#allocation0]]
  $region49: #{tpu_custom_call.1} parent=0
    _
  %s7 = ssub.s32 1, %s5
  %s8 = scalar_select 0, %s7, %s5
  loop: start=0, step=1, limit=4
  $region2: #{tpu_custom_call.1} parent=0 // loop_pre_header
    _
  $region3: #{tpu_custom_call.1} parent=0 // loop_header
    %s10 = sphi 0, %s14
    %p11 = scmp.ge.s32.totalorder %s10, 4
    %s20 = sphi 0, %s22
    %s23 = sphi 0, %s20
    %s24 = sphi 0, %s23
    %s40 = sphi 0, %s24
    %s44 = sphi 0, %s44
    %s46 = sphi 0, %s44
    %s47 = sphi 0, %s46
    %s61 = sphi 0, %s47
    %s65 = sphi 0, %s65
    %s67 = sphi 0, %s65
    %s68 = sphi 0, %s67
    %s82 = sphi 0, %s68
    %s88 = sphi 0, %s90
    %s91 = sphi 0, %s88
    %s92 = sphi 0, %s91
    %s108 = sphi 0, %s92
    %s114 = sphi 0, %s116
    %s117 = sphi 0, %s114
    %s118 = sphi 0, %s117
    %s134 = sphi 0, %s118
  $region4: #{tpu_custom_call.1} parent=0 // loop_header_branch
    %13 = sbr.rel (%p11) target = $region8
  $region5: #{tpu_custom_call.1} parent=0 // loop_body
    %s15 = ssub.s32 %s10, 1
    %s16 = ssub.s32 %s10, 2
    %s17 = sadd.s32 %s10, 1
    %s18 = ssub.s32 %s10, %s17
    %p19 = scmp.eq.s32.totalorder %s18, 0
    %s21 = sadd.s32 %s20, 1
    %s22 = scalar_select %p19, %s20, %s21
    %p25 = pneg %p19
    %p26 = scmp.eq.s32.totalorder %s10, 1
    %p27 = por %p25, %p26
    %p28 = scmp.ne.s32.totalorder %s20, %s23
    %p29 = scmp.eq.s32.totalorder %s10, 0
    %p30 = por %p28, %p29
    %p31 = scmp.ne.s32.totalorder %s20, %s23
    %p32 = scmp.eq.s32.totalorder %s15, 1
    %p33 = por %p31, %p32
    %p34 = scmp.ne.s32.totalorder %s23, %s24
    %p35 = scmp.eq.s32.totalorder %s15, 0
    %p36 = por %p34, %p35
    %p37 = scmp.ne.s32.totalorder %s23, %s24
    %p38 = scmp.eq.s32.totalorder %s16, 1
    %p39 = por %p37, %p38
    %p41 = scmp.ne.s32.totalorder %s24, %s40
    %p42 = scmp.eq.s32.totalorder %s16, 0
    %p43 = por %p41, %p42
    %s45 = sadd.s32 %s44, 1
    %p48 = scmp.eq.s32.totalorder %s10, 1
    %p49 = scmp.ne.s32.totalorder %s44, %s46
    %p50 = scmp.eq.s32.totalorder %s10, 0
    %p51 = por %p49, %p50
    %p52 = scmp.ne.s32.totalorder %s44, %s46
    %p53 = scmp.eq.s32.totalorder %s15, 1
    %p54 = por %p52, %p53
    %p55 = scmp.ne.s32.totalorder %s46, %s47
    %p56 = scmp.eq.s32.totalorder %s15, 0
    %p57 = por %p55, %p56
    %p58 = scmp.ne.s32.totalorder %s46, %s47
    %p59 = scmp.eq.s32.totalorder %s16, 1
    %p60 = por %p58, %p59
    %p62 = scmp.ne.s32.totalorder %s47, %s61
    %p63 = scmp.eq.s32.totalorder %s16, 0
    %p64 = por %p62, %p63
    %s66 = sadd.s32 %s65, 1
    %p69 = scmp.eq.s32.totalorder %s10, 1
    %p70 = scmp.ne.s32.totalorder %s65, %s67
    %p71 = scmp.eq.s32.totalorder %s10, 0
    %p72 = por %p70, %p71
    %p73 = scmp.ne.s32.totalorder %s65, %s67
    %p74 = scmp.eq.s32.totalorder %s15, 1
    %p75 = por %p73, %p74
    %p76 = scmp.ne.s32.totalorder %s67, %s68
    %p77 = scmp.eq.s32.totalorder %s15, 0
    %p78 = por %p76, %p77
    %p79 = scmp.ne.s32.totalorder %s67, %s68
    %p80 = scmp.eq.s32.totalorder %s16, 1
    %p81 = por %p79, %p80
    %p83 = scmp.ne.s32.totalorder %s68, %s82
    %p84 = scmp.eq.s32.totalorder %s16, 0
    %p85 = por %p83, %p84
    %s86 = ssub.s32 %s10, %s17
    %p87 = scmp.eq.s32.totalorder %s86, 0
    %s89 = sadd.s32 %s88, 1
    %s90 = scalar_select %p87, %s88, %s89
    %p93 = pneg %p87
    %p94 = scmp.eq.s32.totalorder %s10, 1
    %p95 = por %p93, %p94
    %p96 = scmp.ne.s32.totalorder %s88, %s91
    %p97 = scmp.eq.s32.totalorder %s10, 0
    %p98 = por %p96, %p97
    %p99 = scmp.ne.s32.totalorder %s88, %s91
    %p100 = scmp.eq.s32.totalorder %s15, 1
    %p101 = por %p99, %p100
    %p102 = scmp.ne.s32.totalorder %s91, %s92
    %p103 = scmp.eq.s32.totalorder %s15, 0
    %p104 = por %p102, %p103
    %p105 = scmp.ne.s32.totalorder %s91, %s92
    %p106 = scmp.eq.s32.totalorder %s16, 1
    %p107 = por %p105, %p106
    %p109 = scmp.ne.s32.totalorder %s92, %s108
    %p110 = scmp.eq.s32.totalorder %s16, 0
    %p111 = por %p109, %p110
    %s112 = ssub.s32 %s10, %s17
    %p113 = scmp.eq.s32.totalorder %s112, 0
    %s115 = sadd.s32 %s114, 1
    %s116 = scalar_select %p113, %s114, %s115
    %p119 = pneg %p113
    %p120 = scmp.eq.s32.totalorder %s10, 1
    %p121 = por %p119, %p120
    %p122 = scmp.ne.s32.totalorder %s114, %s117
    %p123 = scmp.eq.s32.totalorder %s10, 0
    %p124 = por %p122, %p123
    %p125 = scmp.ne.s32.totalorder %s114, %s117
    %p126 = scmp.eq.s32.totalorder %s15, 1
    %p127 = por %p125, %p126
    %p128 = scmp.ne.s32.totalorder %s117, %s118
    %p129 = scmp.eq.s32.totalorder %s15, 0
    %p130 = por %p128, %p129
    %p131 = scmp.ne.s32.totalorder %s117, %s118
    %p132 = scmp.eq.s32.totalorder %s16, 1
    %p133 = por %p131, %p132
    %p135 = scmp.ne.s32.totalorder %s118, %s134
    %p136 = scmp.eq.s32.totalorder %s16, 0
    %p137 = por %p135, %p136
    %p138 = scmp.le.s32.totalorder 1, %s10
    %p139 = scmp.lt.s32.totalorder %s10, 3
    %p140 = pnand %p138, %p139
    %p141 = pneg %p140
    // Predicated region
    $region9: #{tpu_custom_call.1} parent=5 // pred_check
      _
    $region10: #{tpu_custom_call.1} parent=5 // pred_check_branch
      %143 = sbr.rel (%p140) target = $region12
    $region11: #{tpu_custom_call.1} parent=5 // pred_region
      %s144 = ssub.s32 %s10, 1
      // Predicated region
      $region13: #{tpu_custom_call.1} parent=11 // pred_check
        %p145 = pneg %p57
      $region14: #{tpu_custom_call.1} parent=11 // pred_check_branch
        %147 = sbr.rel (%p145) target = $region16
      $region15: #{tpu_custom_call.1} parent=11 // pred_region
        _
      $region16: #{tpu_custom_call.1} parent=11 // pred_fallthru
        _
      // Predicated region
      $region17: #{tpu_custom_call.1} parent=11 // pred_check
        %p148 = pneg %p78
      $region18: #{tpu_custom_call.1} parent=11 // pred_check_branch
        %150 = sbr.rel (%p148) target = $region20
      $region19: #{tpu_custom_call.1} parent=11 // pred_region
        _
      $region20: #{tpu_custom_call.1} parent=11 // pred_fallthru
        _
    $region12: #{tpu_custom_call.1} parent=5 // pred_fallthru
      _
    %p151 = scmp.lt.s32.totalorder %s10, 2
    // Predicated region
    $region21: #{tpu_custom_call.1} parent=5 // pred_check
      %p152 = pneg %p151
    $region22: #{tpu_custom_call.1} parent=5 // pred_check_branch
      %154 = sbr.rel (%p152) target = $region24
    $region23: #{tpu_custom_call.1} parent=5 // pred_region
      // Predicated region
      $region25: #{tpu_custom_call.1} parent=23 // pred_check
        %p155 = pneg %p30
      $region26: #{tpu_custom_call.1} parent=23 // pred_check_branch
        %157 = sbr.rel (%p155) target = $region28
      $region27: #{tpu_custom_call.1} parent=23 // pred_region
        %s158 = smul.u32 4, %s10
        %p159 = scmp.lt.s32.totalorder %s158, 7
        %s160 = scalar_select %p159, %s158, 7
        %s161 = smul.addr %s160, 4
        %s162 = scalar_lea.vmem %s0, %s161
        %s163 = smul.u32 4, %s10
      $region28: #{tpu_custom_call.1} parent=23 // pred_fallthru
        _
      // Predicated region
      $region29: #{tpu_custom_call.1} parent=23 // pred_check
        %p164 = pneg %p98
      $region30: #{tpu_custom_call.1} parent=23 // pred_check_branch
        %166 = sbr.rel (%p164) target = $region32
      $region31: #{tpu_custom_call.1} parent=23 // pred_region
        %s167 = smul.u32 4, %s10
        %p168 = scmp.lt.s32.totalorder %s167, 7
        %s169 = scalar_select %p168, %s167, 7
        %s170 = smul.addr %s169, 8
        %s171 = scalar_lea.vmem %s3, %s170
        %s172 = smul.u32 4, %s10
      $region32: #{tpu_custom_call.1} parent=23 // pred_fallthru
        _
    $region24: #{tpu_custom_call.1} parent=5 // pred_fallthru
      _
    %p173 = scmp.le.s32.totalorder 1, %s10
    %p174 = scmp.lt.s32.totalorder %s10, 3
    %p175 = pnand %p173, %p174
    %p176 = pneg %p175
    // Predicated region
    $region33: #{tpu_custom_call.1} parent=5 // pred_check
      _
    $region34: #{tpu_custom_call.1} parent=5 // pred_check_branch
      %178 = sbr.rel (%p175) target = $region36
    $region35: #{tpu_custom_call.1} parent=5 // pred_region
      %s179 = ssub.s32 %s10, 1
      %s180 = smul.u32 4, %s15
      %p181 = scmp.lt.s32.totalorder %s180, 7
      %s182 = scalar_select %p181, %s180, 7
      %s183 = smul.addr %s182, 4
      %s184 = scalar_lea.vmem %s0, %s183
      %p185 = pneg %p36
      %p186 = pneg %p33
      %p187 = pneg %p57
      %p188 = pneg %p54
      %p189 = pneg %p78
      %p190 = pneg %p75
      %s191 = smul.u32 4, %s15
      %p192 = scmp.lt.s32.totalorder %s191, 7
      %s193 = scalar_select %p192, %s191, 7
      %s194 = smul.addr %s193, 8
      %s195 = scalar_lea.vmem %s3, %s194
      %p196 = pneg %p104
      %p197 = pneg %p101
      %p198 = pneg %p130
      %p199 = pneg %p127
      %s200 = smul.u32 4, %s15
      %p201 = scmp.lt.s32.totalorder %s200, 7
      %s202 = scalar_select %p201, %s200, 7
      %s203 = smul.addr %s202, 8
      %s204 = scalar_lea.vmem %s4, %s203
      %s205 = smul.u32 4, %s15
      %p206 = scmp.lt.s32.totalorder %s205, 7
      %s207 = scalar_select %p206, %s205, 7
      %s208 = smul.addr %s207, 4
      %s209 = scalar_lea.vmem %s0, %s208
      %s210 = smul.u32 4, %s15
      %s211 = smul.u32 4, %s15
      %p212 = scmp.lt.s32.totalorder %s211, 7
      %s213 = scalar_select %p212, %s211, 7
      %s214 = smul.addr %s213, 8
      %s215 = scalar_lea.vmem %s3, %s214
      %s216 = smul.u32 4, %s15
      %s217 = smul.u32 4, %s15
      %p218 = scmp.lt.s32.totalorder %s217, 7
      %s219 = scalar_select %p218, %s217, 7
      %s220 = smul.addr %s219, 8
      %s221 = scalar_lea.vmem %s4, %s220
      %s222 = smul.u32 4, %s15
      %v224 = vld [vmem:[%s209] sm:$0xf]
      %v225 = vld [vmem:[%s209 + $0x4] sm:$0xf]
      %v226 = vld [vmem:[%s209 + $0x8] sm:$0xf]
      %v227 = vld [vmem:[%s209 + $0xc] sm:$0xf]
      %v228 = vld [vmem:[%s1] sm:$0xf]
      %v229 = vld [vmem:[%s1 + $0x4] sm:$0xf]
      %v230 = vld [vmem:[%s1 + $0x8] sm:$0xf]
      %v231 = vld [vmem:[%s1 + $0xc] sm:$0xf]
      %v232 = vld [vmem:[%s2] sm:$0x1]
      %v234 = vlaneseq
      %v235 = vshrl.u32 %v234, 7
      %v236 = vsub.s32 0, %v235
      %v237 = vrot.slane %v232, %v236
      %v243 = vunpack.c.l.b16 %v224
      %v244 = vunpack.c.l.b16 %v225
      %v245 = vunpack.c.l.b16 %v226
      %v246 = vunpack.c.l.b16 %v227
      %v247 = vpack.c.b16 %v244, %v243
      %v248 = vpack.c.b16 %v246, %v245
      %v253 = vunpack.c.l.b16 %v228
      %v254 = vunpack.c.l.b16 %v229
      %v255 = vunpack.c.l.b16 %v230
      %v256 = vunpack.c.l.b16 %v231
      %v257 = vpack.c.b16 %v254, %v253
      %v258 = vpack.c.b16 %v256, %v255
      %vm261 = vcmask 261120
      %v263 = vsel %vm261, %v247, 0
      %v266 = vsel %vm261, %v248, 0
      %268 = vmatprep.subr.bf16.mxu0 0
      %269 = vmatpush1.bf16.msra.mxu0 0
      %270 = vmatprep.subr.bf16.mxu0 0
      %271 = vmatpush1.bf16.msra.mxu0 0
      %272 = vmatprep.subr.bf16.mxu0 0
      %273 = vmatpush1.bf16.msra.mxu0 0
      %274 = vmatprep.subr.bf16.mxu0 0
      %275 = vmatpush1.bf16.msra.mxu0 0
      %276 = vmatprep.subr.bf16.mxu0 0
      %277 = vmatpush1.bf16.msra.mxu0 0
      %278 = vmatprep.subr.bf16.mxu0 0
      %279 = vmatpush1.bf16.msra.mxu0 0
      %280 = vmatprep.subr.bf16.mxu0 0
      %281 = vmatpush1.bf16.msra.mxu0 %v258
      %282 = vmatprep.subr.bf16.mxu0 0
      %283 = vmatpush1.bf16.msra.mxu0 %v257
      %284 = vmatprep.subr.bf16.mxu0 0
      %285 = vmatpush2.bf16.msra.mxu0 0
      %286 = vmatprep.subr.bf16.mxu0 0
      %287 = vmatpush2.bf16.msra.mxu0 0
      %288 = vmatprep.subr.bf16.mxu0 0
      %289 = vmatpush2.bf16.msra.mxu0 0
      %290 = vmatprep.subr.bf16.mxu0 0
      %291 = vmatpush2.bf16.msra.mxu0 0
      %292 = vmatprep.subr.bf16.mxu0 0
      %293 = vmatpush2.bf16.msra.mxu0 0
      %294 = vmatprep.subr.bf16.mxu0 0
      %295 = vmatpush2.bf16.msra.mxu0 0
      %296 = vmatprep.subr.bf16.mxu0 0
      %297 = vmatpush2.bf16.msra.mxu0 0
      %298 = vmatprep.subr.bf16.mxu0 0
      %299 = vmatpush2.bf16.msra.mxu0 0
      %300 = vmatprep.mubr.bf16.mxu0 0
      %301 = vmatmul.mubr.bf16.gmra.mxu0 %v263
      %v302 = vpop.f32.mrf.mxu0
      %v303 = vadd.f32 %v237, %v302
      %v304 = vpop.f32.mrf.mxu0
      %v305 = vpop.f32.mrf.mxu0
      %v306 = vadd.f32 %v237, %v305
      %v307 = vpop.f32.mrf.mxu0
      %308 = vmatprep.mubr.bf16.mxu0 0
      %309 = vmatmul.mubr.bf16.gmra.mxu0 %v266
      %v310 = vpop.f32.mrf.mxu0
      %v311 = vadd.f32 %v237, %v310
      %v312 = vpop.f32.mrf.mxu0
      %v313 = vpop.f32.mrf.mxu0
      %v314 = vadd.f32 %v237, %v313
      %v315 = vpop.f32.mrf.mxu0
      %316 = vdwg.mxu0
      %v317 = vld [vmem:[%s215] sm:$0xff]
      %v318 = vld [vmem:[%s215 + $0x8] sm:$0xff]
      %v319 = vld [vmem:[%s215 + $0x10] sm:$0xff]
      %v320 = vld [vmem:[%s215 + $0x18] sm:$0xff]
      %v321 = vmul.f32 %v303, 0.5
      %v322 = vmul.f32 %v306, 0.5
      %v323 = vmul.f32 %v311, 0.5
      %v324 = vmul.f32 %v314, 0.5
      %v325 = vmul.f32 %v321, 1.442695
      %v326 = vpow.pop %v325
      %v327 = vmul.f32 %v322, 1.442695
      %v328 = vpow.pop %v327
      %v329 = vmul.f32 %v323, 1.442695
      %v330 = vpow.pop %v329
      %v331 = vmul.f32 %v324, 1.442695
      %v332 = vpow.pop %v331
      %337 = vrot.lane.b32.xlu0 %v326, 112
      %v338 = vpop.permute.xlu0 %337
      %339 = vrot.lane.b32.xlu0 %v328, 112
      %v340 = vpop.permute.xlu0 %339
      %341 = vrot.lane.b32.xlu0 %v330, 112
      %v342 = vpop.permute.xlu0 %341
      %343 = vrot.lane.b32.xlu0 %v332, 112
      %v344 = vpop.permute.xlu0 %343
      %v349 = vmul.f32 %v317, %v338
      %v350 = vmul.f32 %v318, %v340
      %v351 = vmul.f32 %v319, %v342
      %v352 = vmul.f32 %v320, %v344
      %v353 = vadd.f32 %v349, %v303
      %v354 = vadd.f32 %v350, %v306
      %v355 = vadd.f32 %v351, %v311
      %v356 = vadd.f32 %v352, %v314
      %361 = vrot.lane.b32.xlu0 %v353, 32
      %v362 = vpop.permute.xlu0 %361
      %363 = vrot.lane.b32.xlu0 %v354, 32
      %v364 = vpop.permute.xlu0 %363
      %365 = vrot.lane.b32.xlu0 %v355, 32
      %v366 = vpop.permute.xlu0 %365
      %367 = vrot.lane.b32.xlu0 %v356, 32
      %v368 = vpop.permute.xlu0 %367
      %v373 = vsel %vm261, %v303, %v362
      %v374 = vsel %vm261, %v306, %v364
      %v375 = vsel %vm261, %v311, %v366
      %v376 = vsel %vm261, %v314, %v368
      %vm377 = vcmask 392192
      %378 = vst.msk [vmem:[%s221] sm:$0xff] %vm377, %v373
      %379 = vst.msk [vmem:[%s221 + $0x8] sm:$0xff] %vm377, %v374
      %380 = vst.msk [vmem:[%s221 + $0x10] sm:$0xff] %vm377, %v375
      %381 = vst.msk [vmem:[%s221 + $0x18] sm:$0xff] %vm377, %v376
      %s382 = smul.u32 4, %s15
      %p383 = scmp.lt.s32.totalorder %s382, 7
      %s384 = scalar_select %p383, %s382, 7
      %s385 = smul.addr %s384, 8
      %s386 = scalar_lea.vmem %s4, %s385
      // Predicated region
      $region37: #{tpu_custom_call.1} parent=35 // pred_check
        %p387 = pneg %p127
      $region38: #{tpu_custom_call.1} parent=35 // pred_check_branch
        %389 = sbr.rel (%p387) target = $region40
      $region39: #{tpu_custom_call.1} parent=35 // pred_region
        %s390 = smul.u32 4, %s15
      $region40: #{tpu_custom_call.1} parent=35 // pred_fallthru
        _
    $region36: #{tpu_custom_call.1} parent=5 // pred_fallthru
      _
    %p391 = scmp.le.s32.totalorder 2, %s10
    // Predicated region
    $region41: #{tpu_custom_call.1} parent=5 // pred_check
      %p392 = pneg %p391
    $region42: #{tpu_custom_call.1} parent=5 // pred_check_branch
      %394 = sbr.rel (%p392) target = $region44
    $region43: #{tpu_custom_call.1} parent=5 // pred_region
      %s395 = ssub.s32 %s10, 2
      // Predicated region
      $region45: #{tpu_custom_call.1} parent=43 // pred_check
        %p396 = pneg %p133
      $region46: #{tpu_custom_call.1} parent=43 // pred_check_branch
        %398 = sbr.rel (%p396) target = $region48
      $region47: #{tpu_custom_call.1} parent=43 // pred_region
        %s399 = smul.u32 4, %s16
        %p400 = scmp.lt.s32.totalorder %s399, 7
        %s401 = scalar_select %p400, %s399, 7
        %s402 = smul.addr %s401, 8
        %s403 = scalar_lea.vmem %s4, %s402
      $region48: #{tpu_custom_call.1} parent=43 // pred_fallthru
        _
    $region44: #{tpu_custom_call.1} parent=5 // pred_fallthru
      _
  $region6: #{tpu_custom_call.1} parent=0 // loop_footer
    %s14 = sadd.s32 1, %s10
  $region7: #{tpu_custom_call.1} parent=0 // loop_footer_branch
    %9 = sbr.rel target = $region3
  $region8: #{tpu_custom_call.1} parent=0 // loop_exit
    _

</llo_original>
